<compile_context>
chip_gen: v7x
topology: tpu7x:2x2x1
jax: 0.10.0
libtpu: 0.0.40
codegen_flags: <defaults>
</compile_context>

<pallas_src>
import functools

import jax
import jax.numpy as jnp
from jax.experimental import pallas as pl
from jax.experimental.pallas import tpu as pltpu


def _round_up(x, m):
    return ((x + m - 1) // m) * m


def _gmu_kernel(xc_ref, w12_ref, b12_ref, watt_ref, batt_ref,
                wcls_ref, bcls_ref, out_ref, *, size_out):
    """One row-tile of the gated multimodal forward pass.

    With x_cat = cat(x1, x2) and W12 = block_diag(W1, W2):
      h12 = tanh(x_cat @ W12 + cat(b1, b2))   == cat(h1, h2)
      z   = sigmoid(h12 @ Watt + batt)
      f   = z * h1 + (1 - z) * h2
      y   = f @ Wcls_pad + bcls_pad           (lane-dense, zero-padded columns)

    Dots take bf16 operands and accumulate in f32; elementwise math is f32.
    """
    xc = xc_ref[...]

    # Single fused MXU matmul for both modality hidden layers.
    h12 = jnp.tanh(
        jnp.dot(xc, w12_ref[...], preferred_element_type=jnp.float32)
        + b12_ref[...])

    # Attention gate over cat(h1, h2): K = 2*size_out, native MXU width.
    z = jax.nn.sigmoid(
        jnp.dot(h12.astype(watt_ref.dtype), watt_ref[...],
                preferred_element_type=jnp.float32)
        + batt_ref[...])

    h1 = h12[:, :size_out]
    h2 = h12[:, size_out:]
    fusion = z * h1 + (1.0 - z) * h2

    out_ref[...] = (
        jnp.dot(fusion.astype(wcls_ref.dtype), wcls_ref[...],
                preferred_element_type=jnp.float32)
        + bcls_ref[...]).astype(out_ref.dtype)


@functools.partial(jax.jit, static_argnames=("tm",))
def gated_multimodal_forward(x1, x2, params, *, tm=256):
    """x1: (B, S, size_in1), x2: (B, S, size_in2) -> (B, S, out_channel)."""
    B, S, in1 = x1.shape
    _, _, in2 = x2.shape
    w1, b1, w2, b2, watt, batt, wcls, bcls = params
    size_out = w1.shape[1]
    out_channel = wcls.shape[1]
    in12 = in1 + in2

    cdtype = jnp.bfloat16  # streaming / MXU-operand dtype (f32 accumulation)

    M = B * S
    tm = min(tm, _round_up(M, 8))     # don't over-tile tiny inputs
    Mp = _round_up(M, tm)             # pad rows so the grid divides evenly
    OCp = _round_up(out_channel, 128)  # lane-dense output

    # ---- input / weight prep (layout plumbing only) -------------------------
    xc = jnp.concatenate(
        [x1.reshape(M, in1), x2.reshape(M, in2)], axis=-1).astype(cdtype)
    if Mp != M:
        xc = jnp.pad(xc, ((0, Mp - M), (0, 0)))

    # Block-diagonal weight so h12 = cat(h1, h2) comes out of one matmul.
    w12 = jnp.zeros((in12, 2 * size_out), cdtype)
    w12 = w12.at[:in1, :size_out].set(w1.astype(cdtype))
    w12 = w12.at[in1:, size_out:].set(w2.astype(cdtype))
    b12 = jnp.concatenate([b1, b2]).reshape(1, 2 * size_out).astype(jnp.float32)

    watt_c = watt.astype(cdtype)
    batt_r = batt.reshape(1, size_out).astype(jnp.float32)

    # Zero-pad classifier columns up to a multiple of 128 (unmasked stores).
    wcls_p = jnp.pad(wcls, ((0, 0), (0, OCp - out_channel))).astype(cdtype)
    bcls_p = jnp.pad(bcls, (0, OCp - out_channel)).reshape(1, OCp).astype(jnp.float32)

    grid = (Mp // tm,)
    row_spec = lambda shape: pl.BlockSpec(shape, lambda i: (i, 0))
    full_spec = lambda shape: pl.BlockSpec(shape, lambda i: (0, 0))

    out = pl.pallas_call(
        functools.partial(_gmu_kernel, size_out=size_out),
        out_shape=jax.ShapeDtypeStruct((Mp, OCp), x1.dtype),
        grid_spec=pltpu.PrefetchScalarGridSpec(
            num_scalar_prefetch=0,
            grid=grid,
            in_specs=[
                row_spec((tm, in12)),              # x_cat row tile
                full_spec((in12, 2 * size_out)),   # W12 = diag(W1, W2)
                full_spec((1, 2 * size_out)),      # cat(b1, b2)
                full_spec((2 * size_out, size_out)),  # Watt
                full_spec((1, size_out)),             # batt
                full_spec((size_out, OCp)),           # Wcls (lane-padded)
                full_spec((1, OCp)),                  # bcls (lane-padded)
            ],
            out_specs=row_spec((tm, OCp)),
        ),
        compiler_params=pltpu.CompilerParams(
            dimension_semantics=("parallel",),        # row tiles shard across TCs on v7x
            vmem_limit_bytes=32 * 1024 * 1024,        # explicit budget, safe on v5e/v6e/v7x
        ),
    )(xc, w12, b12, watt_c, batt_r, wcls_p, bcls_p)

    return out[:M, :out_channel].reshape(B, S, out_channel)


def init_params(key, size_in1, size_in2, size_out, out_channel, dtype=jnp.float32):
    """Deterministic synthetic parameters.

    nn.Linear(in, out) stores weight (out, in); we keep the transpose (in, out)
    so the kernel computes x @ W directly.
    """
    ks = jax.random.split(key, 8)

    def linear(kw, kb, fan_in, fan_out):
        bound = 1.0 / jnp.sqrt(fan_in)
        w = jax.random.uniform(kw, (fan_in, fan_out), dtype, -bound, bound)
        b = jax.random.uniform(kb, (fan_out,), dtype, -bound, bound)
        return w, b

    w1, b1 = linear(ks[0], ks[1], size_in1, size_out)
    w2, b2 = linear(ks[2], ks[3], size_in2, size_out)
    watt, batt = linear(ks[4], ks[5], size_out * 2, size_out)
    wcls, bcls = linear(ks[6], ks[7], size_out, out_channel)
    return (w1, b1, w2, b2, watt, batt, wcls, bcls)


def _reference(x1, x2, params):
    """Pure-JAX f32 reference matching the PyTorch forward (detach is a no-op)."""
    w1, b1, w2, b2, watt, batt, wcls, bcls = params
    h1 = jnp.tanh(x1 @ w1 + b1)
    h2 = jnp.tanh(x2 @ w2 + b2)
    x = jnp.concatenate((h1, h2), axis=2)
    z = jax.nn.sigmoid(x @ watt + batt)
    fusion = z * h1 + (1.0 - z) * h2
    return fusion @ wcls + bcls


if __name__ == "__main__":
    B, S = 2, 8
    size_in1, size_in2, size_out, out_channel = 32, 48, 64, 8

    key = jax.random.PRNGKey(0)
    kx1, kx2, kp = jax.random.split(key, 3)
    x1 = jax.random.normal(kx1, (B, S, size_in1), jnp.float32)
    x2 = jax.random.normal(kx2, (B, S, size_in2), jnp.float32)
    params = init_params(kp, size_in1, size_in2, size_out, out_channel)

    out = gated_multimodal_forward(x1, x2, params)
    out = jax.block_until_ready(out)
    ref = _reference(x1, x2, params)
    assert out.shape == (B, S, out_channel)
    # bf16 operand streaming -> loosened tolerance vs. the f32 reference.
    assert jnp.allclose(out, ref, atol=5e-2, rtol=5e-2)

    # Exercise multi-tile grid + row padding (M = 15 rows, tm = 8 -> padded to 16).
    B2, S2 = 3, 5
    x1b = jax.random.normal(jax.random.PRNGKey(1), (B2, S2, size_in1), jnp.float32)
    x2b = jax.random.normal(jax.random.PRNGKey(2), (B2, S2, size_in2), jnp.float32)
    out_b = jax.block_until_ready(gated_multimodal_forward(x1b, x2b, params, tm=8))
    ref_b = _reference(x1b, x2b, params)
    assert out_b.shape == (B2, S2, out_channel)
    assert jnp.allclose(out_b, ref_b, atol=5e-2, rtol=5e-2)

    print("KERNEL_OK")
</pallas_src>

<mosaic_0001>
module attributes {stable_mosaic.version = 11 : i64} {
  func.func @_gmu_kernel(%arg0: i32, %arg1: memref<16x80xbf16, #tpu.memory_space<vmem>>, %arg2: memref<80x128xbf16, #tpu.memory_space<vmem>>, %arg3: memref<1x128xf32, #tpu.memory_space<vmem>>, %arg4: memref<128x64xbf16, #tpu.memory_space<vmem>>, %arg5: memref<1x64xf32, #tpu.memory_space<vmem>>, %arg6: memref<64x128xbf16, #tpu.memory_space<vmem>>, %arg7: memref<1x128xf32, #tpu.memory_space<vmem>>, %arg8: memref<16x128xf32, #tpu.memory_space<vmem>>) attributes {dimension_semantics = [#tpu.dimension_semantics<parallel>], iteration_bounds = array<i64: 1>, scalar_prefetch = 0 : i64, scratch_operands = 0 : i64, tpu.core_type = #tpu.core_type<tc>, window_params = [{transform_indices = @transform_0, window_bounds = array<i64: 16, 80>}, {pipeline_mode = #tpu.pipeline_mode<synchronous>, transform_indices = @transform_1, window_bounds = array<i64: 80, 128>}, {pipeline_mode = #tpu.pipeline_mode<synchronous>, transform_indices = @transform_2, window_bounds = array<i64: 1, 128>}, {pipeline_mode = #tpu.pipeline_mode<synchronous>, transform_indices = @transform_3, window_bounds = array<i64: 128, 64>}, {pipeline_mode = #tpu.pipeline_mode<synchronous>, transform_indices = @transform_4, window_bounds = array<i64: 1, 64>}, {pipeline_mode = #tpu.pipeline_mode<synchronous>, transform_indices = @transform_5, window_bounds = array<i64: 64, 128>}, {pipeline_mode = #tpu.pipeline_mode<synchronous>, transform_indices = @transform_6, window_bounds = array<i64: 1, 128>}, {transform_indices = @transform_7, window_bounds = array<i64: 16, 128>}]} {
    %c0 = arith.constant 0 : index
    %c0_0 = arith.constant 0 : index
    %0 = vector.load %arg1[%c0, %c0_0] : memref<16x80xbf16, #tpu.memory_space<vmem>>, vector<16x80xbf16>
    %c0_1 = arith.constant 0 : index
    %c0_2 = arith.constant 0 : index
    %1 = vector.load %arg2[%c0_1, %c0_2] : memref<80x128xbf16, #tpu.memory_space<vmem>>, vector<80x128xbf16>
    %cst = arith.constant dense<0.000000e+00> : vector<16x128xf32>
    %2 = tpu.matmul %0, %1, %cst {dimension_numbers = #tpu.dot_dimension_numbers<[1], [0], [0], [1], [0, 0, 1, 1], [], []>} : vector<16x80xbf16>, vector<80x128xbf16>, vector<16x128xf32> -> vector<16x128xf32>
    %c0_3 = arith.constant 0 : index
    %c0_4 = arith.constant 0 : index
    %3 = vector.load %arg3[%c0_3, %c0_4] : memref<1x128xf32, #tpu.memory_space<vmem>>, vector<1x128xf32>
    %4 = vector.broadcast %3 : vector<1x128xf32> to vector<16x128xf32>
    %5 = arith.addf %2, %4 : vector<16x128xf32>
    %6 = math.tanh %5 : vector<16x128xf32>
    %7 = arith.truncf %6 : vector<16x128xf32> to vector<16x128xbf16>
    %c0_5 = arith.constant 0 : index
    %c0_6 = arith.constant 0 : index
    %8 = vector.load %arg4[%c0_5, %c0_6] : memref<128x64xbf16, #tpu.memory_space<vmem>>, vector<128x64xbf16>
    %cst_7 = arith.constant dense<0.000000e+00> : vector<16x64xf32>
    %9 = tpu.matmul %7, %8, %cst_7 {dimension_numbers = #tpu.dot_dimension_numbers<[1], [0], [0], [1], [0, 0, 1, 1], [], []>} : vector<16x128xbf16>, vector<128x64xbf16>, vector<16x64xf32> -> vector<16x64xf32>
    %c0_8 = arith.constant 0 : index
    %c0_9 = arith.constant 0 : index
    %10 = vector.load %arg5[%c0_8, %c0_9] : memref<1x64xf32, #tpu.memory_space<vmem>>, vector<1x64xf32>
    %11 = vector.broadcast %10 : vector<1x64xf32> to vector<16x64xf32>
    %12 = arith.addf %9, %11 : vector<16x64xf32>
    %13 = arith.negf %12 : vector<16x64xf32>
    %14 = math.exp %13 : vector<16x64xf32>
    %cst_10 = arith.constant 1.000000e+00 : f32
    %15 = vector.broadcast %cst_10 : f32 to vector<16x64xf32>
    %16 = arith.addf %15, %14 : vector<16x64xf32>
    %17 = arith.divf %15, %16 : vector<16x64xf32>
    %18 = vector.extract_strided_slice %6 {offsets = [0, 0], sizes = [16, 64], strides = [1, 1]} : vector<16x128xf32> to vector<16x64xf32>
    %19 = vector.extract_strided_slice %6 {offsets = [0, 64], sizes = [16, 64], strides = [1, 1]} : vector<16x128xf32> to vector<16x64xf32>
    %20 = arith.mulf %17, %18 : vector<16x64xf32>
    %cst_11 = arith.constant 1.000000e+00 : f32
    %21 = vector.broadcast %cst_11 : f32 to vector<16x64xf32>
    %22 = arith.subf %21, %17 : vector<16x64xf32>
    %23 = arith.mulf %22, %19 : vector<16x64xf32>
    %24 = arith.addf %20, %23 : vector<16x64xf32>
    %25 = arith.truncf %24 : vector<16x64xf32> to vector<16x64xbf16>
    %c0_12 = arith.constant 0 : index
    %c0_13 = arith.constant 0 : index
    %26 = vector.load %arg6[%c0_12, %c0_13] : memref<64x128xbf16, #tpu.memory_space<vmem>>, vector<64x128xbf16>
    %cst_14 = arith.constant dense<0.000000e+00> : vector<16x128xf32>
    %27 = tpu.matmul %25, %26, %cst_14 {dimension_numbers = #tpu.dot_dimension_numbers<[1], [0], [0], [1], [0, 0, 1, 1], [], []>} : vector<16x64xbf16>, vector<64x128xbf16>, vector<16x128xf32> -> vector<16x128xf32>
    %c0_15 = arith.constant 0 : index
    %c0_16 = arith.constant 0 : index
    %28 = vector.load %arg7[%c0_15, %c0_16] : memref<1x128xf32, #tpu.memory_space<vmem>>, vector<1x128xf32>
    %29 = vector.broadcast %28 : vector<1x128xf32> to vector<16x128xf32>
    %30 = arith.addf %27, %29 : vector<16x128xf32>
    %c0_17 = arith.constant 0 : index
    %c0_18 = arith.constant 0 : index
    %31 = vector.load %arg8[%c0_17, %c0_18] : memref<16x128xf32, #tpu.memory_space<vmem>>, vector<16x128xf32>
    tpu.vector_store %arg8[%c0_17, %c0_18], %30 {strides = array<i32>} : memref<16x128xf32, #tpu.memory_space<vmem>>, vector<16x128xf32>,
    return
  }
  func.func @transform_0(%arg0: i32) -> (i32, i32) {
    %c0_i32 = arith.constant 0 : i32
    %c0_i32_0 = arith.constant 0 : i32
    return %arg0, %c0_i32 : i32, i32
  }
  func.func @transform_1(%arg0: i32) -> (i32, i32) {
    %c0_i32 = arith.constant 0 : i32
    %c0_i32_0 = arith.constant 0 : i32
    %c0_i32_1 = arith.constant 0 : i32
    return %c0_i32, %c0_i32_0 : i32, i32
  }
  func.func @transform_2(%arg0: i32) -> (i32, i32) {
    %c0_i32 = arith.constant 0 : i32
    %c0_i32_0 = arith.constant 0 : i32
    %c0_i32_1 = arith.constant 0 : i32
    return %c0_i32, %c0_i32_0 : i32, i32
  }
  func.func @transform_3(%arg0: i32) -> (i32, i32) {
    %c0_i32 = arith.constant 0 : i32
    %c0_i32_0 = arith.constant 0 : i32
    %c0_i32_1 = arith.constant 0 : i32
    return %c0_i32, %c0_i32_0 : i32, i32
  }
  func.func @transform_4(%arg0: i32) -> (i32, i32) {
    %c0_i32 = arith.constant 0 : i32
    %c0_i32_0 = arith.constant 0 : i32
    %c0_i32_1 = arith.constant 0 : i32
    return %c0_i32, %c0_i32_0 : i32, i32
  }
  func.func @transform_5(%arg0: i32) -> (i32, i32) {
    %c0_i32 = arith.constant 0 : i32
    %c0_i32_0 = arith.constant 0 : i32
    %c0_i32_1 = arith.constant 0 : i32
    return %c0_i32, %c0_i32_0 : i32, i32
  }
  func.func @transform_6(%arg0: i32) -> (i32, i32) {
    %c0_i32 = arith.constant 0 : i32
    %c0_i32_0 = arith.constant 0 : i32
    %c0_i32_1 = arith.constant 0 : i32
    return %c0_i32, %c0_i32_0 : i32, i32
  }
  func.func @transform_7(%arg0: i32) -> (i32, i32) {
    %c0_i32 = arith.constant 0 : i32
    %c0_i32_0 = arith.constant 0 : i32
    return %arg0, %c0_i32 : i32, i32
  }
}

</mosaic_0001>

<llo_original>
// kernel: gated_multimodal_forward.1
$region0: #{gated_multimodal_forward.1}
  #allocation0 [shape = 'u32[]', space=smem, size = 0x4, offset = 0x4, fixed_abs, tag = 'smem constant byte address 0x4 - core index']
  #allocation1 [shape = 'u32[144,128]{1,0:T(1,128)}', space=vmem, size = 0x12000, scoped, tag = 'internal scratch']
  %s0 = inlined_call_operand.vmem [shape: bf16[16,80], index: 0, kind: input, shape index: {}]
  %s1 = inlined_call_operand.vmem [shape: bf16[80,128], index: 1, kind: input, shape index: {}]
  %s2 = inlined_call_operand.vmem [shape: f32[1,128], index: 2, kind: input, shape index: {}]
  %s3 = inlined_call_operand.vmem [shape: bf16[128,64], index: 3, kind: input, shape index: {}]
  %s4 = inlined_call_operand.vmem [shape: f32[1,64], index: 4, kind: input, shape index: {}]
  %s5 = inlined_call_operand.vmem [shape: bf16[64,128], index: 5, kind: input, shape index: {}]
  %s6 = inlined_call_operand.vmem [shape: f32[1,128], index: 6, kind: input, shape index: {}]
  %s7 = inlined_call_operand.vmem [shape: f32[16,128], index: 7, kind: output, shape index: {}]
  %s8 = sld [smem:[#allocation0]]
  $region38: #{gated_multimodal_forward.1} parent=0
    _
  %s10 = ssub.s32 1, %s8
  %s11 = scalar_select 0, %s10, %s8
  // Predicated region
  $region2: #{gated_multimodal_forward.1} parent=0 // pred_check
    _
  $region3: #{gated_multimodal_forward.1} parent=0 // pred_check_branch
    %13 = sbr.rel (0) target = $region5
  $region4: #{gated_multimodal_forward.1} parent=0 // pred_region
    _
  $region5: #{gated_multimodal_forward.1} parent=0 // pred_fallthru
    _
  // Predicated region
  $region6: #{gated_multimodal_forward.1} parent=0 // pred_check
    _
  $region7: #{gated_multimodal_forward.1} parent=0 // pred_check_branch
    %15 = sbr.rel (0) target = $region9
  $region8: #{gated_multimodal_forward.1} parent=0 // pred_region
    _
  $region9: #{gated_multimodal_forward.1} parent=0 // pred_fallthru
    _
  // Predicated region
  $region10: #{gated_multimodal_forward.1} parent=0 // pred_check
    _
  $region11: #{gated_multimodal_forward.1} parent=0 // pred_check_branch
    %17 = sbr.rel (0) target = $region13
  $region12: #{gated_multimodal_forward.1} parent=0 // pred_region
    _
  $region13: #{gated_multimodal_forward.1} parent=0 // pred_fallthru
    _
  // Predicated region
  $region14: #{gated_multimodal_forward.1} parent=0 // pred_check
    _
  $region15: #{gated_multimodal_forward.1} parent=0 // pred_check_branch
    %19 = sbr.rel (0) target = $region17
  $region16: #{gated_multimodal_forward.1} parent=0 // pred_region
    _
  $region17: #{gated_multimodal_forward.1} parent=0 // pred_fallthru
    _
  // Predicated region
  $region18: #{gated_multimodal_forward.1} parent=0 // pred_check
    _
  $region19: #{gated_multimodal_forward.1} parent=0 // pred_check_branch
    %21 = sbr.rel (0) target = $region21
  $region20: #{gated_multimodal_forward.1} parent=0 // pred_region
    _
  $region21: #{gated_multimodal_forward.1} parent=0 // pred_fallthru
    _
  // Predicated region
  $region22: #{gated_multimodal_forward.1} parent=0 // pred_check
    _
  $region23: #{gated_multimodal_forward.1} parent=0 // pred_check_branch
    %23 = sbr.rel (0) target = $region25
  $region24: #{gated_multimodal_forward.1} parent=0 // pred_region
    _
  $region25: #{gated_multimodal_forward.1} parent=0 // pred_fallthru
    _
  // Predicated region
  $region26: #{gated_multimodal_forward.1} parent=0 // pred_check
    _
  $region27: #{gated_multimodal_forward.1} parent=0 // pred_check_branch
    %25 = sbr.rel (0) target = $region29
  $region28: #{gated_multimodal_forward.1} parent=0 // pred_region
    _
  $region29: #{gated_multimodal_forward.1} parent=0 // pred_fallthru
    _
  %v27 = vld [vmem:[%s0] sm:$0xf]
  %v28 = vld [vmem:[%s0 + $0x4] sm:$0xf]
  %v29 = vld [vmem:[%s1] sm:$0xf]
  %v30 = vld [vmem:[%s1 + $0x4] sm:$0xf]
  %v31 = vld [vmem:[%s1 + $0x8] sm:$0xf]
  %v32 = vld [vmem:[%s1 + $0xc] sm:$0xf]
  %v33 = vld [vmem:[%s1 + $0x10] sm:$0xf]
  %v34 = vld [vmem:[%s1 + $0x14] sm:$0xf]
  %v35 = vld [vmem:[%s1 + $0x18] sm:$0xf]
  %v36 = vld [vmem:[%s1 + $0x1c] sm:$0xf]
  %v37 = vld [vmem:[%s1 + $0x20] sm:$0xf]
  %v38 = vld [vmem:[%s1 + $0x24] sm:$0xf]
  %v39 = vld [vmem:[%s2] sm:$0x1]
  %v41 = vlaneseq
  %v42 = vshrl.u32 %v41, 7
  %v43 = vsub.s32 0, %v42
  %v44 = vrot.slane %v39, %v43
  %v48 = vunpack.c.l.b16 %v27
  %v49 = vunpack.c.l.b16 %v28
  %v50 = vpack.c.b16 %v49, %v48
  %v61 = vunpack.c.l.b16 %v29
  %v62 = vunpack.c.l.b16 %v30
  %v63 = vunpack.c.l.b16 %v31
  %v64 = vunpack.c.l.b16 %v32
  %v65 = vunpack.c.l.b16 %v33
  %v66 = vunpack.c.l.b16 %v34
  %v67 = vunpack.c.l.b16 %v35
  %v68 = vunpack.c.l.b16 %v36
  %v69 = vunpack.c.l.b16 %v37
  %v70 = vunpack.c.l.b16 %v38
  %v71 = vpack.c.b16 %v62, %v61
  %v72 = vpack.c.b16 %v64, %v63
  %v73 = vpack.c.b16 %v66, %v65
  %v74 = vpack.c.b16 %v68, %v67
  %v75 = vpack.c.b16 %v70, %v69
  %vm81 = vcmask 654336
  %v83 = vsel %vm81, %v50, 0
  %85 = vmatprep.subr.bf16.mxu0 0
  %86 = vmatpush1.bf16.msra.mxu0 %v71
  %87 = vmatprep.subr.bf16.mxu0 0
  %88 = vmatpush1.bf16.msra.mxu0 %v72
  %89 = vmatprep.subr.bf16.mxu0 0
  %90 = vmatpush1.bf16.msra.mxu0 %v73
  %91 = vmatprep.subr.bf16.mxu0 0
  %92 = vmatpush1.bf16.msra.mxu0 %v74
  %93 = vmatprep.subr.bf16.mxu0 0
  %94 = vmatpush1.bf16.msra.mxu0 %v75
  %95 = vmatprep.subr.bf16.mxu0 0
  %96 = vmatpush1.bf16.msra.mxu0 0
  %97 = vmatprep.subr.bf16.mxu0 0
  %98 = vmatpush1.bf16.msra.mxu0 0
  %99 = vmatprep.subr.bf16.mxu0 0
  %100 = vmatpush1.bf16.msra.mxu0 0
  %101 = vmatprep.subr.bf16.mxu0 0
  %102 = vmatpush1.bf16.msra.mxu0 0
  %103 = vmatprep.subr.bf16.mxu0 0
  %104 = vmatpush1.bf16.msra.mxu0 0
  %105 = vmatprep.subr.bf16.mxu0 0
  %106 = vmatpush1.bf16.msra.mxu0 0
  %107 = vmatprep.subr.bf16.mxu0 0
  %108 = vmatpush1.bf16.msra.mxu0 0
  %109 = vmatprep.subr.bf16.mxu0 0
  %110 = vmatpush1.bf16.msra.mxu0 0
  %111 = vmatprep.subr.bf16.mxu0 0
  %112 = vmatpush1.bf16.msra.mxu0 0
  %113 = vmatprep.subr.bf16.mxu0 0
  %114 = vmatpush1.bf16.msra.mxu0 0
  %115 = vmatprep.subr.bf16.mxu0 0
  %116 = vmatpush1.bf16.msra.mxu0 0
  %117 = vmatprep.mubr.bf16.mxu0 0
  %118 = vmatmul.mubr.bf16.gmra.mrb[0].mxu0 %v83
  %v119 = vpop.f32.mrb[0].mxu0
  %v120 = vadd.f32 %v44, %v119
  %v121 = vpop.f32.mrb[0].mxu0
  %v122 = vpop.f32.mrb[0].mxu0
  %v123 = vadd.f32 %v44, %v122
  %v124 = vpop.f32.mrb[0].mxu0
  %125 = vdwg.mxu0
  %v126 = vtanh.pop %v120
  %v127 = vtanh.pop %v123
  %v128 = vpack.c.bf16 %v127, %v126
  %v129 = vld [vmem:[%s3] sm:$0xf]
  %v130 = vld [vmem:[%s3 + $0x4] sm:$0xf]
  %v131 = vld [vmem:[%s3 + $0x8] sm:$0xf]
  %v132 = vld [vmem:[%s3 + $0xc] sm:$0xf]
  %v133 = vld [vmem:[%s3 + $0x10] sm:$0xf]
  %v134 = vld [vmem:[%s3 + $0x14] sm:$0xf]
  %v135 = vld [vmem:[%s3 + $0x18] sm:$0xf]
  %v136 = vld [vmem:[%s3 + $0x1c] sm:$0xf]
  %v137 = vld [vmem:[%s3 + $0x20] sm:$0xf]
  %v138 = vld [vmem:[%s3 + $0x24] sm:$0xf]
  %v139 = vld [vmem:[%s3 + $0x28] sm:$0xf]
  %v140 = vld [vmem:[%s3 + $0x2c] sm:$0xf]
  %v141 = vld [vmem:[%s3 + $0x30] sm:$0xf]
  %v142 = vld [vmem:[%s3 + $0x34] sm:$0xf]
  %v143 = vld [vmem:[%s3 + $0x38] sm:$0xf]
  %v144 = vld [vmem:[%s3 + $0x3c] sm:$0xf]
  %v145 = vld [vmem:[%s4] sm:$0x1]
  %v147 = vlaneseq
  %v148 = vshrl.u32 %v147, 7
  %v149 = vsub.s32 0, %v148
  %v150 = vrot.slane %v145, %v149
  %v168 = vunpack.c.l.b16 %v129
  %v169 = vunpack.c.l.b16 %v130
  %v170 = vunpack.c.l.b16 %v131
  %v171 = vunpack.c.l.b16 %v132
  %v172 = vunpack.c.l.b16 %v133
  %v173 = vunpack.c.l.b16 %v134
  %v174 = vunpack.c.l.b16 %v135
  %v175 = vunpack.c.l.b16 %v136
  %v176 = vunpack.c.l.b16 %v137
  %v177 = vunpack.c.l.b16 %v138
  %v178 = vunpack.c.l.b16 %v139
  %v179 = vunpack.c.l.b16 %v140
  %v180 = vunpack.c.l.b16 %v141
  %v181 = vunpack.c.l.b16 %v142
  %v182 = vunpack.c.l.b16 %v143
  %v183 = vunpack.c.l.b16 %v144
  %v184 = vpack.c.b16 %v169, %v168
  %v185 = vpack.c.b16 %v171, %v170
  %v186 = vpack.c.b16 %v173, %v172
  %v187 = vpack.c.b16 %v175, %v174
  %v188 = vpack.c.b16 %v177, %v176
  %v189 = vpack.c.b16 %v179, %v178
  %v190 = vpack.c.b16 %v181, %v180
  %v191 = vpack.c.b16 %v183, %v182
  %200 = vmatprep.subr.bf16.mxu0 0
  %201 = vmatpush1.bf16.msra.mxu0 %v184
  %202 = vmatprep.subr.bf16.mxu0 0
  %203 = vmatpush1.bf16.msra.mxu0 %v185
  %204 = vmatprep.subr.bf16.mxu0 0
  %205 = vmatpush1.bf16.msra.mxu0 %v186
  %206 = vmatprep.subr.bf16.mxu0 0
  %207 = vmatpush1.bf16.msra.mxu0 %v187
  %208 = vmatprep.subr.bf16.mxu0 0
  %209 = vmatpush1.bf16.msra.mxu0 %v188
  %210 = vmatprep.subr.bf16.mxu0 0
  %211 = vmatpush1.bf16.msra.mxu0 %v189
  %212 = vmatprep.subr.bf16.mxu0 0
  %213 = vmatpush1.bf16.msra.mxu0 %v190
  %214 = vmatprep.subr.bf16.mxu0 0
  %215 = vmatpush1.bf16.msra.mxu0 %v191
  %216 = vmatprep.subr.bf16.mxu0 0
  %217 = vmatpush1.bf16.msra.mxu0 0
  %218 = vmatprep.subr.bf16.mxu0 0
  %219 = vmatpush1.bf16.msra.mxu0 0
  %220 = vmatprep.subr.bf16.mxu0 0
  %221 = vmatpush1.bf16.msra.mxu0 0
  %222 = vmatprep.subr.bf16.mxu0 0
  %223 = vmatpush1.bf16.msra.mxu0 0
  %224 = vmatprep.subr.bf16.mxu0 0
  %225 = vmatpush1.bf16.msra.mxu0 0
  %226 = vmatprep.subr.bf16.mxu0 0
  %227 = vmatpush1.bf16.msra.mxu0 0
  %228 = vmatprep.subr.bf16.mxu0 0
  %229 = vmatpush1.bf16.msra.mxu0 0
  %230 = vmatprep.subr.bf16.mxu0 0
  %231 = vmatpush1.bf16.msra.mxu0 0
  %232 = vmatprep.mubr.bf16.mxu0 0
  %233 = vmatmul.mubr.bf16.gmra.mrb[0].mxu0 %v128
  %v234 = vpop.f32.mrb[0].mxu0
  %v235 = vadd.f32 %v150, %v234
  %v236 = vpop.f32.mrb[0].mxu0
  %v237 = vpop.f32.mrb[0].mxu0
  %v238 = vadd.f32 %v150, %v237
  %v239 = vpop.f32.mrb[0].mxu0
  %240 = vdwg.mxu0
  %v241 = vxor.u32 %v235, 2147483648
  %v242 = vxor.u32 %v238, 2147483648
  %v243 = vmul.f32 %v241, 1.442695
  %v244 = vpow.pop %v243
  %v245 = vmul.f32 %v242, 1.442695
  %v246 = vpow.pop %v245
  %v247 = vadd.f32 %v244, 1.0
  %v248 = vadd.f32 %v246, 1.0
  %v249 = vrcp.pop %v247
  %v250 = vmul.f32 1.0, %v249
  %v251 = vrcp.pop %v248
  %v252 = vmul.f32 1.0, %v251
  %v253 = vmul.f32 %v250, %v126
  %v254 = vmul.f32 %v252, %v127
  %v255 = vsub.f32 1.0, %v250
  %v256 = vsub.f32 1.0, %v252
  %259 = vrot.lane.b32.xlu0 %v126, 64
  %v260 = vpop.permute.xlu0 %259
  %261 = vrot.lane.b32.xlu0 %v127, 64
  %v262 = vpop.permute.xlu0 %261
  %v265 = vmul.f32 %v255, %v260
  %v266 = vmul.f32 %v256, %v262
  %v267 = vadd.f32 %v253, %v265
  %v268 = vadd.f32 %v254, %v266
  %v269 = vpack.c.bf16 %v268, %v267
  %v270 = vld [vmem:[%s5] sm:$0xf]
  %v271 = vld [vmem:[%s5 + $0x4] sm:$0xf]
  %v272 = vld [vmem:[%s5 + $0x8] sm:$0xf]
  %v273 = vld [vmem:[%s5 + $0xc] sm:$0xf]
  %v274 = vld [vmem:[%s5 + $0x10] sm:$0xf]
  %v275 = vld [vmem:[%s5 + $0x14] sm:$0xf]
  %v276 = vld [vmem:[%s5 + $0x18] sm:$0xf]
  %v277 = vld [vmem:[%s5 + $0x1c] sm:$0xf]
  %v278 = vld [vmem:[%s6] sm:$0x1]
  %v280 = vlaneseq
  %v281 = vshrl.u32 %v280, 7
  %v282 = vsub.s32 0, %v281
  %v283 = vrot.slane %v278, %v282
  %v293 = vunpack.c.l.b16 %v270
  %v294 = vunpack.c.l.b16 %v271
  %v295 = vunpack.c.l.b16 %v272
  %v296 = vunpack.c.l.b16 %v273
  %v297 = vunpack.c.l.b16 %v274
  %v298 = vunpack.c.l.b16 %v275
  %v299 = vunpack.c.l.b16 %v276
  %v300 = vunpack.c.l.b16 %v277
  %v301 = vpack.c.b16 %v294, %v293
  %v302 = vpack.c.b16 %v296, %v295
  %v303 = vpack.c.b16 %v298, %v297
  %v304 = vpack.c.b16 %v300, %v299
  %vm309 = vcmask 523264
  %v311 = vsel %vm309, %v269, 0
  %313 = vmatprep.subr.bf16.mxu0 0
  %314 = vmatpush1.bf16.msra.mxu0 %v301
  %315 = vmatprep.subr.bf16.mxu0 0
  %316 = vmatpush1.bf16.msra.mxu0 %v302
  %317 = vmatprep.subr.bf16.mxu0 0
  %318 = vmatpush1.bf16.msra.mxu0 %v303
  %319 = vmatprep.subr.bf16.mxu0 0
  %320 = vmatpush1.bf16.msra.mxu0 %v304
  %321 = vmatprep.subr.bf16.mxu0 0
  %322 = vmatpush1.bf16.msra.mxu0 0
  %323 = vmatprep.subr.bf16.mxu0 0
  %324 = vmatpush1.bf16.msra.mxu0 0
  %325 = vmatprep.subr.bf16.mxu0 0
  %326 = vmatpush1.bf16.msra.mxu0 0
  %327 = vmatprep.subr.bf16.mxu0 0
  %328 = vmatpush1.bf16.msra.mxu0 0
  %329 = vmatprep.subr.bf16.mxu0 0
  %330 = vmatpush1.bf16.msra.mxu0 0
  %331 = vmatprep.subr.bf16.mxu0 0
  %332 = vmatpush1.bf16.msra.mxu0 0
  %333 = vmatprep.subr.bf16.mxu0 0
  %334 = vmatpush1.bf16.msra.mxu0 0
  %335 = vmatprep.subr.bf16.mxu0 0
  %336 = vmatpush1.bf16.msra.mxu0 0
  %337 = vmatprep.subr.bf16.mxu0 0
  %338 = vmatpush1.bf16.msra.mxu0 0
  %339 = vmatprep.subr.bf16.mxu0 0
  %340 = vmatpush1.bf16.msra.mxu0 0
  %341 = vmatprep.subr.bf16.mxu0 0
  %342 = vmatpush1.bf16.msra.mxu0 0
  %343 = vmatprep.subr.bf16.mxu0 0
  %344 = vmatpush1.bf16.msra.mxu0 0
  %345 = vmatprep.mubr.bf16.mxu0 0
  %346 = vmatmul.mubr.bf16.gmra.mrb[0].mxu0 %v311
  %v347 = vpop.f32.mrb[0].mxu0
  %v348 = vadd.f32 %v283, %v347
  %v349 = vpop.f32.mrb[0].mxu0
  %v350 = vpop.f32.mrb[0].mxu0
  %v351 = vadd.f32 %v283, %v350
  %v352 = vpop.f32.mrb[0].mxu0
  %353 = vdwg.mxu0
  %354 = vst [vmem:[%s7] sm:$0xff] %v348
  %355 = vst [vmem:[%s7 + $0x8] sm:$0xff] %v351
  // Predicated region
  $region30: #{gated_multimodal_forward.1} parent=0 // pred_check
    _
  $region31: #{gated_multimodal_forward.1} parent=0 // pred_check_branch
    %357 = sbr.rel (0) target = $region33
  $region32: #{gated_multimodal_forward.1} parent=0 // pred_region
    _
  $region33: #{gated_multimodal_forward.1} parent=0 // pred_fallthru
    _
  // Predicated region
  $region34: #{gated_multimodal_forward.1} parent=0 // pred_check
    _
  $region35: #{gated_multimodal_forward.1} parent=0 // pred_check_branch
    %359 = sbr.rel (0) target = $region37
  $region36: #{gated_multimodal_forward.1} parent=0 // pred_region
    _
  $region37: #{gated_multimodal_forward.1} parent=0 // pred_fallthru
    _

</llo_original>
